<compile_context>
chip_gen: v7x
topology: tpu7x:2x2x1
jax: 0.10.0
libtpu: 0.0.40
codegen_flags: <defaults>
</compile_context>

<pallas_src>
import functools

import jax
import jax.numpy as jnp
from jax.experimental import pallas as pl
from jax.experimental.pallas import tpu as pltpu


# ---------------------------------------------------------------------------
# Fused Pallas kernel: whole MLP on one row tile (transposed layout).
#   x_ref : (in_dim, tm)           -- one lane-dense tile of x^T
#   refs  : w0,b0, w1,b1, ..., o_ref
#           w_i : (N_i, K_i)  (torch layout: out_features x in_features)
#           b_i : (N_i, 1)
#   o_ref : (out_dim, tm)          -- lane-dense output tile
# ---------------------------------------------------------------------------
def _mlp_fused_kernel(x_ref, *refs, n_layers):
    wb_refs = refs[: 2 * n_layers]
    o_ref = refs[2 * n_layers]

    h = x_ref[...]  # (K0, tm), rows of x along the 128-lane axis
    for li in range(n_layers):
        w = wb_refs[2 * li][...]        # (N, K)
        b = wb_refs[2 * li + 1][...]    # (N, 1) -> broadcasts over lanes (rows)
        h = jnp.dot(w, h, preferred_element_type=jnp.float32) + b
        if li < n_layers - 1:           # ReLU after every Linear except the last
            h = jnp.maximum(h, 0.0)
    o_ref[...] = h.astype(o_ref.dtype)


def mlp_forward(params, x, *, tm=256):
    """Reproduces MLP.forward: flatten leading dims, apply layers, restore shape."""
    lead_shape = x.shape[:-1]
    in_dim = x.shape[-1]
    out_dim = params[-1][0].shape[0]
    n_layers = len(params)

    x2d = x.reshape(-1, in_dim)
    M = x2d.shape[0]

    # Pad the row dimension once (single pad for the whole fused MLP).
    Mp = ((M + tm - 1) // tm) * tm
    if Mp != M:
        x2d = jnp.pad(x2d, ((0, Mp - M), (0, 0)))

    # Transposed layout: rows on the lane axis -> lane-dense loads/stores.
    xT = x2d.T  # (in_dim, Mp)

    in_specs = [pl.BlockSpec((in_dim, tm), lambda i: (0, i))]
    args = [xT]
    for (w, b) in params:
        N, K = w.shape
        # Full weight / bias resident in VMEM (constant block index).
        in_specs.append(pl.BlockSpec((N, K), lambda i: (0, 0)))
        in_specs.append(pl.BlockSpec((N, 1), lambda i: (0, 0)))
        args.append(w)
        args.append(b.reshape(N, 1))

    kernel = functools.partial(_mlp_fused_kernel, n_layers=n_layers)

    outT = pl.pallas_call(
        kernel,
        out_shape=jax.ShapeDtypeStruct((out_dim, Mp), x.dtype),
        grid_spec=pltpu.PrefetchScalarGridSpec(
            num_scalar_prefetch=0,
            grid=(Mp // tm,),
            in_specs=in_specs,
            out_specs=pl.BlockSpec((out_dim, tm), lambda i: (0, i)),
        ),
        compiler_params=pltpu.CompilerParams(
            dimension_semantics=("parallel",)),  # row tiles shard across TCs (v7x)
    )(*args)

    out = outT.T[:M]  # single un-pad slice on the tiny final output
    return out.reshape(*lead_shape, out_dim)


# ---------------------------------------------------------------------------
# Parameters (PyTorch nn.Linear default init, torch weight layout (out, in))
# ---------------------------------------------------------------------------
def init_mlp_params(key, in_dim, out_dim, hidden_list, dtype=jnp.float32):
    dims = [in_dim] + list(hidden_list) + [out_dim]
    params = []
    for fan_in, fan_out in zip(dims[:-1], dims[1:]):
        key, kw, kb = jax.random.split(key, 3)
        bound = 1.0 / (fan_in ** 0.5)
        w = jax.random.uniform(kw, (fan_out, fan_in), dtype, -bound, bound)
        b = jax.random.uniform(kb, (fan_out,), dtype, -bound, bound)
        params.append((w, b))
    return params


def mlp_forward_ref(params, x):
    """Pure-JAX reference for correctness check."""
    lead_shape = x.shape[:-1]
    h = x.reshape(-1, x.shape[-1])
    n_layers = len(params)
    for li, (w, b) in enumerate(params):
        h = h @ w.T + b
        if li < n_layers - 1:
            h = jnp.maximum(h, 0.0)
    return h.reshape(*lead_shape, -1)


if __name__ == "__main__":
    in_dim, out_dim = 16, 4
    hidden_list = [32, 32]

    key = jax.random.PRNGKey(0)
    kx, kp = jax.random.split(key)

    # small input: (batch=2, seq=8, in_dim=16) -> flattened to 16 rows
    x = jax.random.normal(kx, (2, 8, in_dim), dtype=jnp.float32)
    params = init_mlp_params(kp, in_dim, out_dim, hidden_list)

    y = mlp_forward(params, x)
    y = jax.block_until_ready(y)

    y_ref = mlp_forward_ref(params, x)
    assert y.shape == (2, 8, out_dim), y.shape
    assert jnp.allclose(y, y_ref, atol=1e-4, rtol=1e-4), "mismatch vs reference"

    print("KERNEL_OK")
</pallas_src>

<mosaic_0001>
module attributes {stable_mosaic.version = 11 : i64} {
  func.func @_mlp_fused_kernel(%arg0: i32, %arg1: memref<16x256xf32, #tpu.memory_space<vmem>>, %arg2: memref<32x16xf32, #tpu.memory_space<vmem>>, %arg3: memref<32x1xf32, #tpu.memory_space<vmem>>, %arg4: memref<32x32xf32, #tpu.memory_space<vmem>>, %arg5: memref<32x1xf32, #tpu.memory_space<vmem>>, %arg6: memref<4x32xf32, #tpu.memory_space<vmem>>, %arg7: memref<4x1xf32, #tpu.memory_space<vmem>>, %arg8: memref<4x256xf32, #tpu.memory_space<vmem>>) attributes {dimension_semantics = [#tpu.dimension_semantics<parallel>], iteration_bounds = array<i64: 1>, scalar_prefetch = 0 : i64, scratch_operands = 0 : i64, tpu.core_type = #tpu.core_type<tc>, window_params = [{transform_indices = @transform_0, window_bounds = array<i64: 16, 256>}, {pipeline_mode = #tpu.pipeline_mode<synchronous>, transform_indices = @transform_1, window_bounds = array<i64: 32, 16>}, {pipeline_mode = #tpu.pipeline_mode<synchronous>, transform_indices = @transform_2, window_bounds = array<i64: 32, 1>}, {pipeline_mode = #tpu.pipeline_mode<synchronous>, transform_indices = @transform_3, window_bounds = array<i64: 32, 32>}, {pipeline_mode = #tpu.pipeline_mode<synchronous>, transform_indices = @transform_4, window_bounds = array<i64: 32, 1>}, {pipeline_mode = #tpu.pipeline_mode<synchronous>, transform_indices = @transform_5, window_bounds = array<i64: 4, 32>}, {pipeline_mode = #tpu.pipeline_mode<synchronous>, transform_indices = @transform_6, window_bounds = array<i64: 4, 1>}, {transform_indices = @transform_7, window_bounds = array<i64: 4, 256>}]} {
    %c0 = arith.constant 0 : index
    %c0_0 = arith.constant 0 : index
    %0 = vector.load %arg1[%c0, %c0_0] : memref<16x256xf32, #tpu.memory_space<vmem>>, vector<16x256xf32>
    %c0_1 = arith.constant 0 : index
    %c0_2 = arith.constant 0 : index
    %1 = vector.load %arg2[%c0_1, %c0_2] : memref<32x16xf32, #tpu.memory_space<vmem>>, vector<32x16xf32>
    %c0_3 = arith.constant 0 : index
    %c0_4 = arith.constant 0 : index
    %2 = vector.load %arg3[%c0_3, %c0_4] : memref<32x1xf32, #tpu.memory_space<vmem>>, vector<32x1xf32>
    %cst = arith.constant dense<0.000000e+00> : vector<32x256xf32>
    %3 = tpu.matmul %1, %0, %cst {dimension_numbers = #tpu.dot_dimension_numbers<[1], [0], [0], [1], [0, 0, 1, 1], [], []>} : vector<32x16xf32>, vector<16x256xf32>, vector<32x256xf32> -> vector<32x256xf32>
    %4 = vector.broadcast %2 : vector<32x1xf32> to vector<32x256xf32>
    %5 = arith.addf %3, %4 : vector<32x256xf32>
    %cst_5 = arith.constant 0.000000e+00 : f32
    %6 = vector.broadcast %cst_5 : f32 to vector<32x256xf32>
    %7 = arith.maximumf %5, %6 : vector<32x256xf32>
    %c0_6 = arith.constant 0 : index
    %c0_7 = arith.constant 0 : index
    %8 = vector.load %arg4[%c0_6, %c0_7] : memref<32x32xf32, #tpu.memory_space<vmem>>, vector<32x32xf32>
    %c0_8 = arith.constant 0 : index
    %c0_9 = arith.constant 0 : index
    %9 = vector.load %arg5[%c0_8, %c0_9] : memref<32x1xf32, #tpu.memory_space<vmem>>, vector<32x1xf32>
    %cst_10 = arith.constant dense<0.000000e+00> : vector<32x256xf32>
    %10 = tpu.matmul %8, %7, %cst_10 {dimension_numbers = #tpu.dot_dimension_numbers<[1], [0], [0], [1], [0, 0, 1, 1], [], []>} : vector<32x32xf32>, vector<32x256xf32>, vector<32x256xf32> -> vector<32x256xf32>
    %11 = vector.broadcast %9 : vector<32x1xf32> to vector<32x256xf32>
    %12 = arith.addf %10, %11 : vector<32x256xf32>
    %cst_11 = arith.constant 0.000000e+00 : f32
    %13 = vector.broadcast %cst_11 : f32 to vector<32x256xf32>
    %14 = arith.maximumf %12, %13 : vector<32x256xf32>
    %c0_12 = arith.constant 0 : index
    %c0_13 = arith.constant 0 : index
    %15 = vector.load %arg6[%c0_12, %c0_13] : memref<4x32xf32, #tpu.memory_space<vmem>>, vector<4x32xf32>
    %c0_14 = arith.constant 0 : index
    %c0_15 = arith.constant 0 : index
    %16 = vector.load %arg7[%c0_14, %c0_15] : memref<4x1xf32, #tpu.memory_space<vmem>>, vector<4x1xf32>
    %cst_16 = arith.constant dense<0.000000e+00> : vector<4x256xf32>
    %17 = tpu.matmul %15, %14, %cst_16 {dimension_numbers = #tpu.dot_dimension_numbers<[1], [0], [0], [1], [0, 0, 1, 1], [], []>} : vector<4x32xf32>, vector<32x256xf32>, vector<4x256xf32> -> vector<4x256xf32>
    %18 = vector.broadcast %16 : vector<4x1xf32> to vector<4x256xf32>
    %19 = arith.addf %17, %18 : vector<4x256xf32>
    %c0_17 = arith.constant 0 : index
    %c0_18 = arith.constant 0 : index
    %20 = vector.load %arg8[%c0_17, %c0_18] : memref<4x256xf32, #tpu.memory_space<vmem>>, vector<4x256xf32>
    tpu.vector_store %arg8[%c0_17, %c0_18], %19 {strides = array<i32>} : memref<4x256xf32, #tpu.memory_space<vmem>>, vector<4x256xf32>,
    return
  }
  func.func @transform_0(%arg0: i32) -> (i32, i32) {
    %c0_i32 = arith.constant 0 : i32
    %c0_i32_0 = arith.constant 0 : i32
    return %c0_i32, %arg0 : i32, i32
  }
  func.func @transform_1(%arg0: i32) -> (i32, i32) {
    %c0_i32 = arith.constant 0 : i32
    %c0_i32_0 = arith.constant 0 : i32
    %c0_i32_1 = arith.constant 0 : i32
    return %c0_i32, %c0_i32_0 : i32, i32
  }
  func.func @transform_2(%arg0: i32) -> (i32, i32) {
    %c0_i32 = arith.constant 0 : i32
    %c0_i32_0 = arith.constant 0 : i32
    %c0_i32_1 = arith.constant 0 : i32
    return %c0_i32, %c0_i32_0 : i32, i32
  }
  func.func @transform_3(%arg0: i32) -> (i32, i32) {
    %c0_i32 = arith.constant 0 : i32
    %c0_i32_0 = arith.constant 0 : i32
    %c0_i32_1 = arith.constant 0 : i32
    return %c0_i32, %c0_i32_0 : i32, i32
  }
  func.func @transform_4(%arg0: i32) -> (i32, i32) {
    %c0_i32 = arith.constant 0 : i32
    %c0_i32_0 = arith.constant 0 : i32
    %c0_i32_1 = arith.constant 0 : i32
    return %c0_i32, %c0_i32_0 : i32, i32
  }
  func.func @transform_5(%arg0: i32) -> (i32, i32) {
    %c0_i32 = arith.constant 0 : i32
    %c0_i32_0 = arith.constant 0 : i32
    %c0_i32_1 = arith.constant 0 : i32
    return %c0_i32, %c0_i32_0 : i32, i32
  }
  func.func @transform_6(%arg0: i32) -> (i32, i32) {
    %c0_i32 = arith.constant 0 : i32
    %c0_i32_0 = arith.constant 0 : i32
    %c0_i32_1 = arith.constant 0 : i32
    return %c0_i32, %c0_i32_0 : i32, i32
  }
  func.func @transform_7(%arg0: i32) -> (i32, i32) {
    %c0_i32 = arith.constant 0 : i32
    %c0_i32_0 = arith.constant 0 : i32
    return %c0_i32, %arg0 : i32, i32
  }
}

</mosaic_0001>

<llo_original>
// kernel: tpu_custom_call.1
$region0: #{tpu_custom_call.1}
  #allocation0 [shape = 'u32[]', space=smem, size = 0x4, offset = 0x4, fixed_abs, tag = 'smem constant byte address 0x4 - core index']
  #allocation1 [shape = 'u32[144,128]{1,0:T(1,128)}', space=vmem, size = 0x12000, scoped, tag = 'internal scratch']
  %s0 = inlined_call_operand.vmem [shape: f32[16,256], index: 0, kind: input, shape index: {}]
  %s1 = inlined_call_operand.vmem [shape: f32[32,16], index: 1, kind: input, shape index: {}]
  %s2 = inlined_call_operand.vmem [shape: f32[32,1], index: 2, kind: input, shape index: {}]
  %s3 = inlined_call_operand.vmem [shape: f32[32,32], index: 3, kind: input, shape index: {}]
  %s4 = inlined_call_operand.vmem [shape: f32[32,1], index: 4, kind: input, shape index: {}]
  %s5 = inlined_call_operand.vmem [shape: f32[4,32], index: 5, kind: input, shape index: {}]
  %s6 = inlined_call_operand.vmem [shape: f32[4,1], index: 6, kind: input, shape index: {}]
  %s7 = inlined_call_operand.hbm [shape: f32[4,256], index: 7, kind: output, shape index: {}]
  %s8 = sld [smem:[#allocation0]]
  $region38: #{tpu_custom_call.1} parent=0
    _
  %s10 = ssub.s32 1, %s8
  %s11 = scalar_select 0, %s10, %s8
  $region1: #{tpu_custom_call.1} parent=0
    #allocation2 [shape = 'u8[4096]{0}', space=vmem, size = 0x1000, scoped, tag = 'output window, operand 0, single buffered']
    #allocation3 [shape = 's32[1]{0}', space=sflag, size = 0x4, scoped, tag = 'scoped memory for tpu_custom_call.1']
    %12 = vsyncpa [#allocation3], 0
    // Predicated region
    $region2: #{tpu_custom_call.1} parent=1 // pred_check
      _
    $region3: #{tpu_custom_call.1} parent=1 // pred_check_branch
      %14 = sbr.rel (0) target = $region5
    $region4: #{tpu_custom_call.1} parent=1 // pred_region
      _
    $region5: #{tpu_custom_call.1} parent=1 // pred_fallthru
      _
    // Predicated region
    $region6: #{tpu_custom_call.1} parent=1 // pred_check
      _
    $region7: #{tpu_custom_call.1} parent=1 // pred_check_branch
      %16 = sbr.rel (0) target = $region9
    $region8: #{tpu_custom_call.1} parent=1 // pred_region
      _
    $region9: #{tpu_custom_call.1} parent=1 // pred_fallthru
      _
    // Predicated region
    $region10: #{tpu_custom_call.1} parent=1 // pred_check
      _
    $region11: #{tpu_custom_call.1} parent=1 // pred_check_branch
      %18 = sbr.rel (0) target = $region13
    $region12: #{tpu_custom_call.1} parent=1 // pred_region
      _
    $region13: #{tpu_custom_call.1} parent=1 // pred_fallthru
      _
    // Predicated region
    $region14: #{tpu_custom_call.1} parent=1 // pred_check
      _
    $region15: #{tpu_custom_call.1} parent=1 // pred_check_branch
      %20 = sbr.rel (0) target = $region17
    $region16: #{tpu_custom_call.1} parent=1 // pred_region
      _
    $region17: #{tpu_custom_call.1} parent=1 // pred_fallthru
      _
    // Predicated region
    $region18: #{tpu_custom_call.1} parent=1 // pred_check
      _
    $region19: #{tpu_custom_call.1} parent=1 // pred_check_branch
      %22 = sbr.rel (0) target = $region21
    $region20: #{tpu_custom_call.1} parent=1 // pred_region
      _
    $region21: #{tpu_custom_call.1} parent=1 // pred_fallthru
      _
    // Predicated region
    $region22: #{tpu_custom_call.1} parent=1 // pred_check
      _
    $region23: #{tpu_custom_call.1} parent=1 // pred_check_branch
      %24 = sbr.rel (0) target = $region25
    $region24: #{tpu_custom_call.1} parent=1 // pred_region
      _
    $region25: #{tpu_custom_call.1} parent=1 // pred_fallthru
      _
    // Predicated region
    $region26: #{tpu_custom_call.1} parent=1 // pred_check
      _
    $region27: #{tpu_custom_call.1} parent=1 // pred_check_branch
      %26 = sbr.rel (0) target = $region29
    $region28: #{tpu_custom_call.1} parent=1 // pred_region
      _
    $region29: #{tpu_custom_call.1} parent=1 // pred_fallthru
      _
    %v27 = vld [vmem:[%s0] sm:$0xff]
    %v28 = vld [vmem:[%s0 + $0x8] sm:$0xff]
    %v29 = vld [vmem:[%s0 + $0x10] sm:$0xff]
    %v30 = vld [vmem:[%s0 + $0x18] sm:$0xff]
    %v31 = vld [vmem:[%s1] sm:$0xff]
    %v32 = vld [vmem:[%s1 + $0x8] sm:$0xff]
    %v33 = vld [vmem:[%s1 + $0x10] sm:$0xff]
    %v34 = vld [vmem:[%s1 + $0x18] sm:$0xff]
    %v35 = vld [vmem:[%s2] sm:$0xff]
    %v36 = vld [vmem:[%s2 + $0x8] sm:$0xff]
    %v37 = vld [vmem:[%s2 + $0x10] sm:$0xff]
    %v38 = vld [vmem:[%s2 + $0x18] sm:$0xff]
    %40 = vset.pattern.permute.xlu0 0
    %41 = vperm.xlu0 %40, %v35
    %v42 = vpop.permute.xlu0 %41
    %45 = vset.pattern.permute.xlu0 0
    %46 = vperm.xlu0 %45, %v36
    %v47 = vpop.permute.xlu0 %46
    %50 = vset.pattern.permute.xlu0 0
    %51 = vperm.xlu0 %50, %v37
    %v52 = vpop.permute.xlu0 %51
    %55 = vset.pattern.permute.xlu0 0
    %56 = vperm.xlu0 %55, %v38
    %v57 = vpop.permute.xlu0 %56
    %vm59 = vcmask 130048
    %v61 = vsel %vm59, %v31, 0
    %v64 = vsel %vm59, %v32, 0
    %v67 = vsel %vm59, %v33, 0
    %v70 = vsel %vm59, %v34, 0
    %72 = vmatprep.subr.mxu0 %v28
    %73 = vmatpush1.msra.mxu0 %v27
    %74 = vmatprep.subr.mxu0 %v30
    %75 = vmatpush1.msra.mxu0 %v29
    %76 = vmatprep.subr.mxu0 0.0
    %77 = vmatpush1.msra.mxu0 0.0
    %78 = vmatprep.subr.mxu0 0.0
    %79 = vmatpush1.msra.mxu0 0.0
    %80 = vmatprep.subr.mxu0 0.0
    %81 = vmatpush1.msra.mxu0 0.0
    %82 = vmatprep.subr.mxu0 0.0
    %83 = vmatpush1.msra.mxu0 0.0
    %84 = vmatprep.subr.mxu0 0.0
    %85 = vmatpush1.msra.mxu0 0.0
    %86 = vmatprep.subr.mxu0 0.0
    %87 = vmatpush1.msra.mxu0 0.0
    %88 = vmatprep.subr.mxu0 0.0
    %89 = vmatpush1.msra.mxu0 0.0
    %90 = vmatprep.subr.mxu0 0.0
    %91 = vmatpush1.msra.mxu0 0.0
    %92 = vmatprep.subr.mxu0 0.0
    %93 = vmatpush1.msra.mxu0 0.0
    %94 = vmatprep.subr.mxu0 0.0
    %95 = vmatpush1.msra.mxu0 0.0
    %96 = vmatprep.subr.mxu0 0.0
    %97 = vmatpush1.msra.mxu0 0.0
    %98 = vmatprep.subr.mxu0 0.0
    %99 = vmatpush1.msra.mxu0 0.0
    %100 = vmatprep.subr.mxu0 0.0
    %101 = vmatpush1.msra.mxu0 0.0
    %102 = vmatprep.subr.mxu0 0.0
    %103 = vmatpush1.msra.mxu0 0.0
    %104 = vmatprep.subr.mxu0 0.0
    %105 = vmatpush1.msra.mxu0 0.0
    %106 = vmatprep.subr.mxu0 0.0
    %107 = vmatpush1.msra.mxu0 0.0
    %108 = vmatprep.subr.mxu0 0.0
    %109 = vmatpush1.msra.mxu0 0.0
    %110 = vmatprep.subr.mxu0 0.0
    %111 = vmatpush1.msra.mxu0 0.0
    %112 = vmatprep.subr.mxu0 0.0
    %113 = vmatpush1.msra.mxu0 0.0
    %114 = vmatprep.subr.mxu0 0.0
    %115 = vmatpush1.msra.mxu0 0.0
    %116 = vmatprep.subr.mxu0 0.0
    %117 = vmatpush1.msra.mxu0 0.0
    %118 = vmatprep.subr.mxu0 0.0
    %119 = vmatpush1.msra.mxu0 0.0
    %120 = vmatprep.subr.mxu0 0.0
    %121 = vmatpush1.msra.mxu0 0.0
    %122 = vmatprep.subr.mxu0 0.0
    %123 = vmatpush1.msra.mxu0 0.0
    %124 = vmatprep.subr.mxu0 0.0
    %125 = vmatpush1.msra.mxu0 0.0
    %126 = vmatprep.subr.mxu0 0.0
    %127 = vmatpush1.msra.mxu0 0.0
    %128 = vmatprep.subr.mxu0 0.0
    %129 = vmatpush1.msra.mxu0 0.0
    %130 = vmatprep.subr.mxu0 0.0
    %131 = vmatpush1.msra.mxu0 0.0
    %132 = vmatprep.subr.mxu0 0.0
    %133 = vmatpush1.msra.mxu0 0.0
    %134 = vmatprep.subr.mxu0 0.0
    %135 = vmatpush1.msra.mxu0 0.0
    %136 = vmatprep.mubr.f32.mxu0 0.0
    %137 = vmatmul.mubr.f32.gmra.mrb[0].mxu0 %v61
    %v138 = vpop.f32.mrb[0].mxu0
    %v139 = vadd.f32 %v42, %v138
    %v140 = vpop.f32.mrb[0].mxu0
    %v141 = vadd.f32 %v42, %v140
    %142 = vmatprep.mubr.f32.mxu0 0.0
    %143 = vmatmul.mubr.f32.gmra.mrb[0].mxu0 %v64
    %v144 = vpop.f32.mrb[0].mxu0
    %v145 = vadd.f32 %v47, %v144
    %v146 = vpop.f32.mrb[0].mxu0
    %v147 = vadd.f32 %v47, %v146
    %148 = vmatprep.mubr.f32.mxu0 0.0
    %149 = vmatmul.mubr.f32.gmra.mrb[0].mxu0 %v67
    %v150 = vpop.f32.mrb[0].mxu0
    %v151 = vadd.f32 %v52, %v150
    %v152 = vpop.f32.mrb[0].mxu0
    %v153 = vadd.f32 %v52, %v152
    %154 = vmatprep.mubr.f32.mxu0 0.0
    %155 = vmatmul.mubr.f32.gmra.mrb[0].mxu0 %v70
    %v156 = vpop.f32.mrb[0].mxu0
    %v157 = vadd.f32 %v57, %v156
    %v158 = vpop.f32.mrb[0].mxu0
    %v159 = vadd.f32 %v57, %v158
    %160 = vdwg.mxu0
    %v161 = vmax.f32 %v139, 0.0
    %v162 = vmax.f32 %v141, 0.0
    %v163 = vmax.f32 %v145, 0.0
    %v164 = vmax.f32 %v147, 0.0
    %v165 = vmax.f32 %v151, 0.0
    %v166 = vmax.f32 %v153, 0.0
    %v167 = vmax.f32 %v157, 0.0
    %v168 = vmax.f32 %v159, 0.0
    %v169 = vld [vmem:[%s3] sm:$0xff]
    %v170 = vld [vmem:[%s3 + $0x8] sm:$0xff]
    %v171 = vld [vmem:[%s3 + $0x10] sm:$0xff]
    %v172 = vld [vmem:[%s3 + $0x18] sm:$0xff]
    %v173 = vld [vmem:[%s4] sm:$0xff]
    %v174 = vld [vmem:[%s4 + $0x8] sm:$0xff]
    %v175 = vld [vmem:[%s4 + $0x10] sm:$0xff]
    %v176 = vld [vmem:[%s4 + $0x18] sm:$0xff]
    %178 = vset.pattern.permute.xlu0 0
    %179 = vperm.xlu0 %178, %v173
    %v180 = vpop.permute.xlu0 %179
    %183 = vset.pattern.permute.xlu0 0
    %184 = vperm.xlu0 %183, %v174
    %v185 = vpop.permute.xlu0 %184
    %188 = vset.pattern.permute.xlu0 0
    %189 = vperm.xlu0 %188, %v175
    %v190 = vpop.permute.xlu0 %189
    %193 = vset.pattern.permute.xlu0 0
    %194 = vperm.xlu0 %193, %v176
    %v195 = vpop.permute.xlu0 %194
    %vm197 = vcmask 261120
    %v199 = vsel %vm197, %v169, 0
    %v202 = vsel %vm197, %v170, 0
    %v205 = vsel %vm197, %v171, 0
    %v208 = vsel %vm197, %v172, 0
    %210 = vmatprep.subr.mxu0 %v162
    %211 = vmatpush1.msra.mxu0 %v161
    %212 = vmatprep.subr.mxu0 %v164
    %213 = vmatpush1.msra.mxu0 %v163
    %214 = vmatprep.subr.mxu0 %v166
    %215 = vmatpush1.msra.mxu0 %v165
    %216 = vmatprep.subr.mxu0 %v168
    %217 = vmatpush1.msra.mxu0 %v167
    %218 = vmatprep.subr.mxu0 0.0
    %219 = vmatpush1.msra.mxu0 0.0
    %220 = vmatprep.subr.mxu0 0.0
    %221 = vmatpush1.msra.mxu0 0.0
    %222 = vmatprep.subr.mxu0 0.0
    %223 = vmatpush1.msra.mxu0 0.0
    %224 = vmatprep.subr.mxu0 0.0
    %225 = vmatpush1.msra.mxu0 0.0
    %226 = vmatprep.subr.mxu0 0.0
    %227 = vmatpush1.msra.mxu0 0.0
    %228 = vmatprep.subr.mxu0 0.0
    %229 = vmatpush1.msra.mxu0 0.0
    %230 = vmatprep.subr.mxu0 0.0
    %231 = vmatpush1.msra.mxu0 0.0
    %232 = vmatprep.subr.mxu0 0.0
    %233 = vmatpush1.msra.mxu0 0.0
    %234 = vmatprep.subr.mxu0 0.0
    %235 = vmatpush1.msra.mxu0 0.0
    %236 = vmatprep.subr.mxu0 0.0
    %237 = vmatpush1.msra.mxu0 0.0
    %238 = vmatprep.subr.mxu0 0.0
    %239 = vmatpush1.msra.mxu0 0.0
    %240 = vmatprep.subr.mxu0 0.0
    %241 = vmatpush1.msra.mxu0 0.0
    %242 = vmatprep.subr.mxu0 0.0
    %243 = vmatpush1.msra.mxu0 0.0
    %244 = vmatprep.subr.mxu0 0.0
    %245 = vmatpush1.msra.mxu0 0.0
    %246 = vmatprep.subr.mxu0 0.0
    %247 = vmatpush1.msra.mxu0 0.0
    %248 = vmatprep.subr.mxu0 0.0
    %249 = vmatpush1.msra.mxu0 0.0
    %250 = vmatprep.subr.mxu0 0.0
    %251 = vmatpush1.msra.mxu0 0.0
    %252 = vmatprep.subr.mxu0 0.0
    %253 = vmatpush1.msra.mxu0 0.0
    %254 = vmatprep.subr.mxu0 0.0
    %255 = vmatpush1.msra.mxu0 0.0
    %256 = vmatprep.subr.mxu0 0.0
    %257 = vmatpush1.msra.mxu0 0.0
    %258 = vmatprep.subr.mxu0 0.0
    %259 = vmatpush1.msra.mxu0 0.0
    %260 = vmatprep.subr.mxu0 0.0
    %261 = vmatpush1.msra.mxu0 0.0
    %262 = vmatprep.subr.mxu0 0.0
    %263 = vmatpush1.msra.mxu0 0.0
    %264 = vmatprep.subr.mxu0 0.0
    %265 = vmatpush1.msra.mxu0 0.0
    %266 = vmatprep.subr.mxu0 0.0
    %267 = vmatpush1.msra.mxu0 0.0
    %268 = vmatprep.subr.mxu0 0.0
    %269 = vmatpush1.msra.mxu0 0.0
    %270 = vmatprep.subr.mxu0 0.0
    %271 = vmatpush1.msra.mxu0 0.0
    %272 = vmatprep.subr.mxu0 0.0
    %273 = vmatpush1.msra.mxu0 0.0
    %274 = vmatprep.mubr.f32.mxu0 0.0
    %275 = vmatmul.mubr.f32.gmra.mrb[0].mxu0 %v199
    %v276 = vpop.f32.mrb[0].mxu0
    %v277 = vadd.f32 %v180, %v276
    %v278 = vpop.f32.mrb[0].mxu0
    %v279 = vadd.f32 %v180, %v278
    %280 = vmatprep.mubr.f32.mxu0 0.0
    %281 = vmatmul.mubr.f32.gmra.mrb[0].mxu0 %v202
    %v282 = vpop.f32.mrb[0].mxu0
    %v283 = vadd.f32 %v185, %v282
    %v284 = vpop.f32.mrb[0].mxu0
    %v285 = vadd.f32 %v185, %v284
    %286 = vmatprep.mubr.f32.mxu0 0.0
    %287 = vmatmul.mubr.f32.gmra.mrb[0].mxu0 %v205
    %v288 = vpop.f32.mrb[0].mxu0
    %v289 = vadd.f32 %v190, %v288
    %v290 = vpop.f32.mrb[0].mxu0
    %v291 = vadd.f32 %v190, %v290
    %292 = vmatprep.mubr.f32.mxu0 0.0
    %293 = vmatmul.mubr.f32.gmra.mrb[0].mxu0 %v208
    %v294 = vpop.f32.mrb[0].mxu0
    %v295 = vadd.f32 %v195, %v294
    %v296 = vpop.f32.mrb[0].mxu0
    %v297 = vadd.f32 %v195, %v296
    %298 = vdwg.mxu0
    %v299 = vmax.f32 %v277, 0.0
    %v300 = vmax.f32 %v279, 0.0
    %v301 = vmax.f32 %v283, 0.0
    %v302 = vmax.f32 %v285, 0.0
    %v303 = vmax.f32 %v289, 0.0
    %v304 = vmax.f32 %v291, 0.0
    %v305 = vmax.f32 %v295, 0.0
    %v306 = vmax.f32 %v297, 0.0
    %v307 = vld [vmem:[%s5] sm:$0xf]
    %v308 = vld [vmem:[%s6] sm:$0xf]
    %310 = vset.pattern.permute.xlu0 0
    %311 = vperm.xlu0 %310, %v308
    %v312 = vpop.permute.xlu0 %311
    %v315 = vsel %vm197, %v307, 0
    %317 = vmatprep.subr.mxu0 %v300
    %318 = vmatpush1.msra.mxu0 %v299
    %319 = vmatprep.subr.mxu0 %v302
    %320 = vmatpush1.msra.mxu0 %v301
    %321 = vmatprep.subr.mxu0 %v304
    %322 = vmatpush1.msra.mxu0 %v303
    %323 = vmatprep.subr.mxu0 %v306
    %324 = vmatpush1.msra.mxu0 %v305
    %325 = vmatprep.subr.mxu0 0.0
    %326 = vmatpush1.msra.mxu0 0.0
    %327 = vmatprep.subr.mxu0 0.0
    %328 = vmatpush1.msra.mxu0 0.0
    %329 = vmatprep.subr.mxu0 0.0
    %330 = vmatpush1.msra.mxu0 0.0
    %331 = vmatprep.subr.mxu0 0.0
    %332 = vmatpush1.msra.mxu0 0.0
    %333 = vmatprep.subr.mxu0 0.0
    %334 = vmatpush1.msra.mxu0 0.0
    %335 = vmatprep.subr.mxu0 0.0
    %336 = vmatpush1.msra.mxu0 0.0
    %337 = vmatprep.subr.mxu0 0.0
    %338 = vmatpush1.msra.mxu0 0.0
    %339 = vmatprep.subr.mxu0 0.0
    %340 = vmatpush1.msra.mxu0 0.0
    %341 = vmatprep.subr.mxu0 0.0
    %342 = vmatpush1.msra.mxu0 0.0
    %343 = vmatprep.subr.mxu0 0.0
    %344 = vmatpush1.msra.mxu0 0.0
    %345 = vmatprep.subr.mxu0 0.0
    %346 = vmatpush1.msra.mxu0 0.0
    %347 = vmatprep.subr.mxu0 0.0
    %348 = vmatpush1.msra.mxu0 0.0
    %349 = vmatprep.subr.mxu0 0.0
    %350 = vmatpush1.msra.mxu0 0.0
    %351 = vmatprep.subr.mxu0 0.0
    %352 = vmatpush1.msra.mxu0 0.0
    %353 = vmatprep.subr.mxu0 0.0
    %354 = vmatpush1.msra.mxu0 0.0
    %355 = vmatprep.subr.mxu0 0.0
    %356 = vmatpush1.msra.mxu0 0.0
    %357 = vmatprep.subr.mxu0 0.0
    %358 = vmatpush1.msra.mxu0 0.0
    %359 = vmatprep.subr.mxu0 0.0
    %360 = vmatpush1.msra.mxu0 0.0
    %361 = vmatprep.subr.mxu0 0.0
    %362 = vmatpush1.msra.mxu0 0.0
    %363 = vmatprep.subr.mxu0 0.0
    %364 = vmatpush1.msra.mxu0 0.0
    %365 = vmatprep.subr.mxu0 0.0
    %366 = vmatpush1.msra.mxu0 0.0
    %367 = vmatprep.subr.mxu0 0.0
    %368 = vmatpush1.msra.mxu0 0.0
    %369 = vmatprep.subr.mxu0 0.0
    %370 = vmatpush1.msra.mxu0 0.0
    %371 = vmatprep.subr.mxu0 0.0
    %372 = vmatpush1.msra.mxu0 0.0
    %373 = vmatprep.subr.mxu0 0.0
    %374 = vmatpush1.msra.mxu0 0.0
    %375 = vmatprep.subr.mxu0 0.0
    %376 = vmatpush1.msra.mxu0 0.0
    %377 = vmatprep.subr.mxu0 0.0
    %378 = vmatpush1.msra.mxu0 0.0
    %379 = vmatprep.subr.mxu0 0.0
    %380 = vmatpush1.msra.mxu0 0.0
    %381 = vmatprep.mubr.f32.mxu0 0.0
    %382 = vmatmul.mubr.f32.gmra.mrb[0].mxu0 %v315
    %v383 = vpop.f32.mrb[0].mxu0
    %v384 = vadd.f32 %v312, %v383
    %v385 = vpop.f32.mrb[0].mxu0
    %v386 = vadd.f32 %v312, %v385
    %387 = vdwg.mxu0
    %v390 = vcombine.low %v384, %v386
    %392 = vst [vmem:[#allocation2] sm:$0xff] %v390
    // Predicated region
    $region30: #{tpu_custom_call.1} parent=1 // pred_check
      _
    $region31: #{tpu_custom_call.1} parent=1 // pred_check_branch
      %394 = sbr.rel (0) target = $region33
    $region32: #{tpu_custom_call.1} parent=1 // pred_region
      %s396 = ssub.s32 128, 128
      %397 = vsyncadd [#allocation3], %s396
      %s399 = sshll.u32 [#allocation2], 4
      %s400 = int_to_ptr.vmem [resolvable:$true] %s399
      %402 = dma.vmem_to_hbm [thread:$0]  %s400, 128, %s7, [#allocation3]
    $region33: #{tpu_custom_call.1} parent=1 // pred_fallthru
      _
    // Predicated region
    $region34: #{tpu_custom_call.1} parent=1 // pred_check
      _
    $region35: #{tpu_custom_call.1} parent=1 // pred_check_branch
      %404 = sbr.rel (0) target = $region37
    $region36: #{tpu_custom_call.1} parent=1 // pred_region
      %405 = dma.done [#allocation3], 128
    $region37: #{tpu_custom_call.1} parent=1 // pred_fallthru
      _
    %406 = vsyncpa [#allocation3], 1

</llo_original>
